<compile_context>
chip_gen: v6e
topology: v6e:2x2x1
jax: 0.10.0
libtpu: 0.0.40
codegen_flags: <defaults>
</compile_context>

<pallas_src>
import numpy as np
import jax
import jax.numpy as jnp
from jax.experimental import pallas as pl
from jax.experimental.pallas import tpu as pltpu

D_IN = 4        # (x, y, z, t)
D_OUT = 3       # velocity
HIDDEN = 32
MAX_TILE_N = 8192   # points per grid step (lane axis); ~1.2 MiB VMEM/step total


def _round_up(x, m):
    return ((x + m - 1) // m) * m


def velocity_kernel(bounds_ref, xt_ref, w1_ref, b1_ref, w2_ref, b2_ref,
                    w3_ref, b3_ref, out_ref):
    # Feature-major tile: (D_IN, TILE_N), points on the lane axis.
    xt = xt_ref[...]                       # (4, TILE_N) f32
    x = xt[0:1, :]                         # (1, TILE_N)
    y = xt[1:2, :]
    z = xt[2:3, :]
    t = xt[3:4, :]

    # Out-of-bounds mask from SMEM scalars: [lo_x, lo_y, lo_z, hi_x, hi_y, hi_z]
    mask_out = ((x < bounds_ref[0]) | (x > bounds_ref[3]) |
                (y < bounds_ref[1]) | (y > bounds_ref[4]) |
                (z < bounds_ref[2]) | (z > bounds_ref[5]))    # (1, TILE_N)

    # Layer 1 (K=4): VPU broadcast-FMAs, keeps the MXU free.
    w1 = w1_ref[...]                       # (HIDDEN, 4) = W1^T
    h = (w1[:, 0:1] * x + w1[:, 1:2] * y +
         w1[:, 2:3] * z + w1[:, 3:4] * t + b1_ref[...])       # (HIDDEN, TILE_N)
    h = jnp.maximum(h, 0.0)

    # Layer 2: 32x32 on the MXU with a lane-dense RHS.
    h = jnp.dot(w2_ref[...], h, preferred_element_type=jnp.float32) + b2_ref[...]
    h = jnp.maximum(h, 0.0)

    # Layer 3: (3, 32) @ (32, TILE_N) -> (3, TILE_N)
    v = jnp.dot(w3_ref[...], h, preferred_element_type=jnp.float32) + b3_ref[...]

    # vel[~mask_out] = net(...)[..., :3]; vel[mask_out] stays 0
    out_ref[...] = jnp.where(mask_out, 0.0, v).astype(out_ref.dtype)


def velocity_aabb_sur(xt, bounds, params):
    """xt: (..., 4) float32, bounds: (2, 3) float32 -> vel: (..., 3) float32."""
    w1, b1, w2, b2, w3, b3 = params
    lead_shape = xt.shape[:-1]
    n = int(np.prod(lead_shape)) if lead_shape else 1
    xt_flat = xt.reshape(n, D_IN).astype(jnp.float32)

    # Adaptive lane tile: multiple of 128, capped at MAX_TILE_N.
    tile_n = min(MAX_TILE_N, _round_up(n, 128))
    n_pad = _round_up(n, tile_n)

    # Feature-major layout: (4, N) with points on the lane axis.
    xt_t = xt_flat.T
    if n_pad != n:
        xt_t = jnp.pad(xt_t, ((0, 0), (0, n_pad - n)))

    bounds_flat = bounds.reshape(-1).astype(jnp.float32)          # (6,)
    w1_t = w1.T.astype(jnp.float32)                               # (HIDDEN, 4)
    b1_c = b1.reshape(HIDDEN, 1).astype(jnp.float32)
    w2_t = w2.T.astype(jnp.float32)                               # (HIDDEN, HIDDEN)
    b2_c = b2.reshape(HIDDEN, 1).astype(jnp.float32)
    w3_t = w3.T.astype(jnp.float32)                               # (D_OUT, HIDDEN)
    b3_c = b3.reshape(D_OUT, 1).astype(jnp.float32)

    grid = (n_pad // tile_n,)

    out_t = pl.pallas_call(
        velocity_kernel,
        out_shape=jax.ShapeDtypeStruct((D_OUT, n_pad), jnp.float32),
        grid_spec=pltpu.PrefetchScalarGridSpec(
            num_scalar_prefetch=0,
            grid=grid,
            in_specs=[
                pl.BlockSpec(memory_space=pltpu.MemorySpace.SMEM),     # bounds (6,)
                pl.BlockSpec((D_IN, tile_n), lambda i: (0, i)),        # xt tile
                pl.BlockSpec((HIDDEN, D_IN), lambda i: (0, 0)),        # w1^T
                pl.BlockSpec((HIDDEN, 1), lambda i: (0, 0)),           # b1
                pl.BlockSpec((HIDDEN, HIDDEN), lambda i: (0, 0)),      # w2^T
                pl.BlockSpec((HIDDEN, 1), lambda i: (0, 0)),           # b2
                pl.BlockSpec((D_OUT, HIDDEN), lambda i: (0, 0)),       # w3^T
                pl.BlockSpec((D_OUT, 1), lambda i: (0, 0)),            # b3
            ],
            out_specs=pl.BlockSpec((D_OUT, tile_n), lambda i: (0, i)),
        ),
        compiler_params=pltpu.CompilerParams(
            dimension_semantics=("parallel",)),
    )(bounds_flat, xt_t, w1_t, b1_c, w2_t, b2_c, w3_t, b3_c)

    return out_t[:, :n].T.reshape(*lead_shape, D_OUT)


def reference(xt, bounds, params):
    """Pure-JAX reference matching the PyTorch forward semantics."""
    w1, b1, w2, b2, w3, b3 = params
    pts = xt[..., :3]
    mask_out = jnp.any((pts < bounds[0]) | (pts > bounds[1]), axis=-1)
    h = jnp.maximum(xt @ w1 + b1, 0.0)
    h = jnp.maximum(h @ w2 + b2, 0.0)
    v = h @ w3 + b3
    vel = v[..., :3]
    return jnp.where(mask_out[..., None], 0.0, vel)


def init_params(key):
    k1, k2, k3 = jax.random.split(key, 3)
    w1 = jax.random.normal(k1, (D_IN, HIDDEN), jnp.float32) * (1.0 / np.sqrt(D_IN))
    b1 = jnp.zeros((1, HIDDEN), jnp.float32)
    w2 = jax.random.normal(k2, (HIDDEN, HIDDEN), jnp.float32) * (1.0 / np.sqrt(HIDDEN))
    b2 = jnp.zeros((1, HIDDEN), jnp.float32)
    w3 = jax.random.normal(k3, (HIDDEN, D_OUT), jnp.float32) * (1.0 / np.sqrt(HIDDEN))
    b3 = jnp.zeros((1, D_OUT), jnp.float32)
    return (w1, b1, w2, b2, w3, b3)


if __name__ == "__main__":
    key = jax.random.PRNGKey(0)
    k_x, k_x2, k_p = jax.random.split(key, 3)

    # aabb (2,3) and surround (2,3) -> bounds (2,3), as in __init__
    aabb = jnp.array([[-1.5, -1.5, -1.5],
                      [1.5, 1.5, 1.5]], jnp.float32)
    surround = jnp.array([[-1.0, -1.0, -1.0],
                          [1.0, 1.0, 1.0]], jnp.float32)
    bounds = (surround - aabb[0]) * 2.0 / (aabb[1] - aabb[0]) - 1.0   # (2, 3)

    params = init_params(k_p)

    # Test 1: small — batch=2, 256 rays, 4 features (single tile).
    xt = jax.random.uniform(k_x, (2, 256, D_IN), jnp.float32, minval=-1.0, maxval=1.0)
    vel = jax.block_until_ready(velocity_aabb_sur(xt, bounds, params))
    vel_ref = reference(xt, bounds, params)
    np.testing.assert_allclose(np.asarray(vel), np.asarray(vel_ref),
                               rtol=1e-5, atol=1e-5)
    assert vel.shape == (2, 256, 3)

    # Test 2: exercises multi-tile grid + ragged tail padding.
    xt2 = jax.random.uniform(k_x2, (4, 3000, D_IN), jnp.float32, minval=-1.5, maxval=1.5)
    vel2 = jax.block_until_ready(velocity_aabb_sur(xt2, bounds, params))
    vel2_ref = reference(xt2, bounds, params)
    np.testing.assert_allclose(np.asarray(vel2), np.asarray(vel2_ref),
                               rtol=1e-5, atol=1e-5)
    assert vel2.shape == (4, 3000, 3)

    print("KERNEL_OK")
</pallas_src>

<mosaic_0001>
module attributes {stable_mosaic.version = 11 : i64} {
  func.func @velocity_kernel(%arg0: i32, %arg1: memref<6xf32, #tpu.memory_space<smem>>, %arg2: memref<4x512xf32, #tpu.memory_space<vmem>>, %arg3: memref<32x4xf32, #tpu.memory_space<vmem>>, %arg4: memref<32x1xf32, #tpu.memory_space<vmem>>, %arg5: memref<32x32xf32, #tpu.memory_space<vmem>>, %arg6: memref<32x1xf32, #tpu.memory_space<vmem>>, %arg7: memref<3x32xf32, #tpu.memory_space<vmem>>, %arg8: memref<3x1xf32, #tpu.memory_space<vmem>>, %arg9: memref<3x512xf32, #tpu.memory_space<vmem>>) attributes {dimension_semantics = [#tpu.dimension_semantics<parallel>], iteration_bounds = array<i64: 1>, scalar_prefetch = 0 : i64, scratch_operands = 0 : i64, tpu.core_type = #tpu.core_type<tc>, window_params = [{transform_indices = @transform_0, window_bounds = array<i64: 6>}, {transform_indices = @transform_1, window_bounds = array<i64: 4, 512>}, {pipeline_mode = #tpu.pipeline_mode<synchronous>, transform_indices = @transform_2, window_bounds = array<i64: 32, 4>}, {pipeline_mode = #tpu.pipeline_mode<synchronous>, transform_indices = @transform_3, window_bounds = array<i64: 32, 1>}, {pipeline_mode = #tpu.pipeline_mode<synchronous>, transform_indices = @transform_4, window_bounds = array<i64: 32, 32>}, {pipeline_mode = #tpu.pipeline_mode<synchronous>, transform_indices = @transform_5, window_bounds = array<i64: 32, 1>}, {pipeline_mode = #tpu.pipeline_mode<synchronous>, transform_indices = @transform_6, window_bounds = array<i64: 3, 32>}, {pipeline_mode = #tpu.pipeline_mode<synchronous>, transform_indices = @transform_7, window_bounds = array<i64: 3, 1>}, {transform_indices = @transform_8, window_bounds = array<i64: 3, 512>}]} {
    %c0 = arith.constant 0 : index
    %c0_0 = arith.constant 0 : index
    %0 = vector.load %arg2[%c0, %c0_0] : memref<4x512xf32, #tpu.memory_space<vmem>>, vector<4x512xf32>
    %1 = vector.extract_strided_slice %0 {offsets = [0, 0], sizes = [1, 512], strides = [1, 1]} : vector<4x512xf32> to vector<1x512xf32>
    %2 = vector.extract_strided_slice %0 {offsets = [1, 0], sizes = [1, 512], strides = [1, 1]} : vector<4x512xf32> to vector<1x512xf32>
    %3 = vector.extract_strided_slice %0 {offsets = [2, 0], sizes = [1, 512], strides = [1, 1]} : vector<4x512xf32> to vector<1x512xf32>
    %4 = vector.extract_strided_slice %0 {offsets = [3, 0], sizes = [1, 512], strides = [1, 1]} : vector<4x512xf32> to vector<1x512xf32>
    %c0_1 = arith.constant 0 : index
    %5 = memref.load %arg1[%c0_1] : memref<6xf32, #tpu.memory_space<smem>>
    %6 = vector.broadcast %5 : f32 to vector<1x512xf32>
    %7 = arith.cmpf olt, %1, %6 : vector<1x512xf32>
    %c3 = arith.constant 3 : index
    %8 = memref.load %arg1[%c3] : memref<6xf32, #tpu.memory_space<smem>>
    %9 = vector.broadcast %8 : f32 to vector<1x512xf32>
    %10 = arith.cmpf ogt, %1, %9 : vector<1x512xf32>
    %11 = arith.ori %7, %10 : vector<1x512xi1>
    %c1 = arith.constant 1 : index
    %12 = memref.load %arg1[%c1] : memref<6xf32, #tpu.memory_space<smem>>
    %13 = vector.broadcast %12 : f32 to vector<1x512xf32>
    %14 = arith.cmpf olt, %2, %13 : vector<1x512xf32>
    %15 = arith.ori %11, %14 : vector<1x512xi1>
    %c4 = arith.constant 4 : index
    %16 = memref.load %arg1[%c4] : memref<6xf32, #tpu.memory_space<smem>>
    %17 = vector.broadcast %16 : f32 to vector<1x512xf32>
    %18 = arith.cmpf ogt, %2, %17 : vector<1x512xf32>
    %19 = arith.ori %15, %18 : vector<1x512xi1>
    %c2 = arith.constant 2 : index
    %20 = memref.load %arg1[%c2] : memref<6xf32, #tpu.memory_space<smem>>
    %21 = vector.broadcast %20 : f32 to vector<1x512xf32>
    %22 = arith.cmpf olt, %3, %21 : vector<1x512xf32>
    %23 = arith.ori %19, %22 : vector<1x512xi1>
    %c5 = arith.constant 5 : index
    %24 = memref.load %arg1[%c5] : memref<6xf32, #tpu.memory_space<smem>>
    %25 = vector.broadcast %24 : f32 to vector<1x512xf32>
    %26 = arith.cmpf ogt, %3, %25 : vector<1x512xf32>
    %27 = arith.ori %23, %26 : vector<1x512xi1>
    %c0_2 = arith.constant 0 : index
    %c0_3 = arith.constant 0 : index
    %28 = vector.load %arg3[%c0_2, %c0_3] : memref<32x4xf32, #tpu.memory_space<vmem>>, vector<32x4xf32>
    %29 = vector.extract_strided_slice %28 {offsets = [0, 0], sizes = [32, 1], strides = [1, 1]} : vector<32x4xf32> to vector<32x1xf32>
    %30 = vector.broadcast %29 : vector<32x1xf32> to vector<32x512xf32>
    %31 = vector.broadcast %1 : vector<1x512xf32> to vector<32x512xf32>
    %32 = arith.mulf %30, %31 : vector<32x512xf32>
    %33 = vector.extract_strided_slice %28 {offsets = [0, 1], sizes = [32, 1], strides = [1, 1]} : vector<32x4xf32> to vector<32x1xf32>
    %34 = vector.broadcast %33 : vector<32x1xf32> to vector<32x512xf32>
    %35 = vector.broadcast %2 : vector<1x512xf32> to vector<32x512xf32>
    %36 = arith.mulf %34, %35 : vector<32x512xf32>
    %37 = arith.addf %32, %36 : vector<32x512xf32>
    %38 = vector.extract_strided_slice %28 {offsets = [0, 2], sizes = [32, 1], strides = [1, 1]} : vector<32x4xf32> to vector<32x1xf32>
    %39 = vector.broadcast %38 : vector<32x1xf32> to vector<32x512xf32>
    %40 = vector.broadcast %3 : vector<1x512xf32> to vector<32x512xf32>
    %41 = arith.mulf %39, %40 : vector<32x512xf32>
    %42 = arith.addf %37, %41 : vector<32x512xf32>
    %43 = vector.extract_strided_slice %28 {offsets = [0, 3], sizes = [32, 1], strides = [1, 1]} : vector<32x4xf32> to vector<32x1xf32>
    %44 = vector.broadcast %43 : vector<32x1xf32> to vector<32x512xf32>
    %45 = vector.broadcast %4 : vector<1x512xf32> to vector<32x512xf32>
    %46 = arith.mulf %44, %45 : vector<32x512xf32>
    %47 = arith.addf %42, %46 : vector<32x512xf32>
    %c0_4 = arith.constant 0 : index
    %c0_5 = arith.constant 0 : index
    %48 = vector.load %arg4[%c0_4, %c0_5] : memref<32x1xf32, #tpu.memory_space<vmem>>, vector<32x1xf32>
    %49 = vector.broadcast %48 : vector<32x1xf32> to vector<32x512xf32>
    %50 = arith.addf %47, %49 : vector<32x512xf32>
    %cst = arith.constant 0.000000e+00 : f32
    %51 = vector.broadcast %cst : f32 to vector<32x512xf32>
    %52 = arith.maximumf %50, %51 : vector<32x512xf32>
    %c0_6 = arith.constant 0 : index
    %c0_7 = arith.constant 0 : index
    %53 = vector.load %arg5[%c0_6, %c0_7] : memref<32x32xf32, #tpu.memory_space<vmem>>, vector<32x32xf32>
    %cst_8 = arith.constant dense<0.000000e+00> : vector<32x512xf32>
    %54 = tpu.matmul %53, %52, %cst_8 {dimension_numbers = #tpu.dot_dimension_numbers<[1], [0], [0], [1], [0, 0, 1, 1], [], []>} : vector<32x32xf32>, vector<32x512xf32>, vector<32x512xf32> -> vector<32x512xf32>
    %c0_9 = arith.constant 0 : index
    %c0_10 = arith.constant 0 : index
    %55 = vector.load %arg6[%c0_9, %c0_10] : memref<32x1xf32, #tpu.memory_space<vmem>>, vector<32x1xf32>
    %56 = vector.broadcast %55 : vector<32x1xf32> to vector<32x512xf32>
    %57 = arith.addf %54, %56 : vector<32x512xf32>
    %cst_11 = arith.constant 0.000000e+00 : f32
    %58 = vector.broadcast %cst_11 : f32 to vector<32x512xf32>
    %59 = arith.maximumf %57, %58 : vector<32x512xf32>
    %c0_12 = arith.constant 0 : index
    %c0_13 = arith.constant 0 : index
    %60 = vector.load %arg7[%c0_12, %c0_13] : memref<3x32xf32, #tpu.memory_space<vmem>>, vector<3x32xf32>
    %cst_14 = arith.constant dense<0.000000e+00> : vector<3x512xf32>
    %61 = tpu.matmul %60, %59, %cst_14 {dimension_numbers = #tpu.dot_dimension_numbers<[1], [0], [0], [1], [0, 0, 1, 1], [], []>} : vector<3x32xf32>, vector<32x512xf32>, vector<3x512xf32> -> vector<3x512xf32>
    %c0_15 = arith.constant 0 : index
    %c0_16 = arith.constant 0 : index
    %62 = vector.load %arg8[%c0_15, %c0_16] : memref<3x1xf32, #tpu.memory_space<vmem>>, vector<3x1xf32>
    %63 = vector.broadcast %62 : vector<3x1xf32> to vector<3x512xf32>
    %64 = arith.addf %61, %63 : vector<3x512xf32>
    %cst_17 = arith.constant 0.000000e+00 : f32
    %65 = vector.shape_cast %27 : vector<1x512xi1> to vector<1x512xi1>
    %66 = vector.broadcast %65 : vector<1x512xi1> to vector<3x512xi1>
    %67 = vector.broadcast %cst_17 : f32 to vector<3x512xf32>
    %68 = arith.select %66, %67, %64 : vector<3x512xi1>, vector<3x512xf32>
    %c0_18 = arith.constant 0 : index
    %c0_19 = arith.constant 0 : index
    %69 = vector.load %arg9[%c0_18, %c0_19] : memref<3x512xf32, #tpu.memory_space<vmem>>, vector<3x512xf32>
    tpu.vector_store %arg9[%c0_18, %c0_19], %68 {strides = array<i32>} : memref<3x512xf32, #tpu.memory_space<vmem>>, vector<3x512xf32>,
    return
  }
  func.func @transform_0(%arg0: i32) -> i32 {
    %c0_i32 = arith.constant 0 : i32
    %c0_i32_0 = arith.constant 0 : i32
    return %c0_i32 : i32
  }
  func.func @transform_1(%arg0: i32) -> (i32, i32) {
    %c0_i32 = arith.constant 0 : i32
    %c0_i32_0 = arith.constant 0 : i32
    return %c0_i32, %arg0 : i32, i32
  }
  func.func @transform_2(%arg0: i32) -> (i32, i32) {
    %c0_i32 = arith.constant 0 : i32
    %c0_i32_0 = arith.constant 0 : i32
    %c0_i32_1 = arith.constant 0 : i32
    return %c0_i32, %c0_i32_0 : i32, i32
  }
  func.func @transform_3(%arg0: i32) -> (i32, i32) {
    %c0_i32 = arith.constant 0 : i32
    %c0_i32_0 = arith.constant 0 : i32
    %c0_i32_1 = arith.constant 0 : i32
    return %c0_i32, %c0_i32_0 : i32, i32
  }
  func.func @transform_4(%arg0: i32) -> (i32, i32) {
    %c0_i32 = arith.constant 0 : i32
    %c0_i32_0 = arith.constant 0 : i32
    %c0_i32_1 = arith.constant 0 : i32
    return %c0_i32, %c0_i32_0 : i32, i32
  }
  func.func @transform_5(%arg0: i32) -> (i32, i32) {
    %c0_i32 = arith.constant 0 : i32
    %c0_i32_0 = arith.constant 0 : i32
    %c0_i32_1 = arith.constant 0 : i32
    return %c0_i32, %c0_i32_0 : i32, i32
  }
  func.func @transform_6(%arg0: i32) -> (i32, i32) {
    %c0_i32 = arith.constant 0 : i32
    %c0_i32_0 = arith.constant 0 : i32
    %c0_i32_1 = arith.constant 0 : i32
    return %c0_i32, %c0_i32_0 : i32, i32
  }
  func.func @transform_7(%arg0: i32) -> (i32, i32) {
    %c0_i32 = arith.constant 0 : i32
    %c0_i32_0 = arith.constant 0 : i32
    %c0_i32_1 = arith.constant 0 : i32
    return %c0_i32, %c0_i32_0 : i32, i32
  }
  func.func @transform_8(%arg0: i32) -> (i32, i32) {
    %c0_i32 = arith.constant 0 : i32
    %c0_i32_0 = arith.constant 0 : i32
    return %c0_i32, %arg0 : i32, i32
  }
}

</mosaic_0001>

<llo_original>
// kernel: tpu_custom_call.1
$region0: #{tpu_custom_call.1}
  #allocation0 [shape = 'u32[]', space=smem, size = 0x4, offset = 0x4, fixed_abs, tag = 'smem constant byte address 0x4 - core index']
  #allocation1 [shape = 'u32[144,128]{1,0:T(1,128)}', space=vmem, size = 0x12000, scoped, tag = 'internal scratch']
  %s0 = inlined_call_operand.vmem [shape: f32[6], index: 0, kind: input, shape index: {}]
  %s1 = inlined_call_operand.vmem [shape: f32[4,512], index: 1, kind: input, shape index: {}]
  %s2 = inlined_call_operand.vmem [shape: f32[32,4], index: 2, kind: input, shape index: {}]
  %s3 = inlined_call_operand.vmem [shape: f32[32,1], index: 3, kind: input, shape index: {}]
  %s4 = inlined_call_operand.vmem [shape: f32[32,32], index: 4, kind: input, shape index: {}]
  %s5 = inlined_call_operand.vmem [shape: f32[32,1], index: 5, kind: input, shape index: {}]
  %s6 = inlined_call_operand.vmem [shape: f32[3,32], index: 6, kind: input, shape index: {}]
  %s7 = inlined_call_operand.vmem [shape: f32[3,1], index: 7, kind: input, shape index: {}]
  %s8 = inlined_call_operand.hbm [shape: f32[3,512], index: 8, kind: output, shape index: {}]
  %s9 = sld [smem:[#allocation0]]
  $region46: #{tpu_custom_call.1} parent=0
    _
  %s11 = ssub.s32 1, %s9
  %s12 = scalar_select 0, %s11, %s9
  $region1: #{tpu_custom_call.1} parent=0
    #allocation2 [shape = 'u8[512]{0}', space=smem, size = 0x200, scoped, tag = 'input window, operand 0, single buffered']
    #allocation3 [shape = 's32[1]{0}', space=sflag, size = 0x4, scoped, tag = 'scoped memory for tpu_custom_call.1']
    #allocation4 [shape = 's32[1]{0}', space=sflag, size = 0x4, scoped, tag = 'scoped memory for tpu_custom_call.1']
    #allocation5 [shape = 'u8[8192]{0}', space=vmem, size = 0x2000, scoped, tag = 'output window, operand 0, single buffered']
    %13 = vsyncpa [#allocation4], 0
    %14 = vsyncpa [#allocation3], 0
    // Predicated region
    $region2: #{tpu_custom_call.1} parent=1 // pred_check
      _
    $region3: #{tpu_custom_call.1} parent=1 // pred_check_branch
      %16 = sbr.rel (0) target = $region5
    $region4: #{tpu_custom_call.1} parent=1 // pred_region
      %s18 = ssub.s32 16, 16
      %19 = vsyncadd [#allocation4], %s18
      %s21 = sshll.u32 %s0, 4
      %s22 = int_to_ptr.vmem [resolvable:$true] %s21
      %24 = dma.vmem_to_smem %s22, 16, [#allocation2], [#allocation4]
    $region5: #{tpu_custom_call.1} parent=1 // pred_fallthru
      _
    // Predicated region
    $region6: #{tpu_custom_call.1} parent=1 // pred_check
      _
    $region7: #{tpu_custom_call.1} parent=1 // pred_check_branch
      %26 = sbr.rel (0) target = $region9
    $region8: #{tpu_custom_call.1} parent=1 // pred_region
      _
    $region9: #{tpu_custom_call.1} parent=1 // pred_fallthru
      _
    // Predicated region
    $region10: #{tpu_custom_call.1} parent=1 // pred_check
      _
    $region11: #{tpu_custom_call.1} parent=1 // pred_check_branch
      %28 = sbr.rel (0) target = $region13
    $region12: #{tpu_custom_call.1} parent=1 // pred_region
      _
    $region13: #{tpu_custom_call.1} parent=1 // pred_fallthru
      _
    // Predicated region
    $region14: #{tpu_custom_call.1} parent=1 // pred_check
      _
    $region15: #{tpu_custom_call.1} parent=1 // pred_check_branch
      %30 = sbr.rel (0) target = $region17
    $region16: #{tpu_custom_call.1} parent=1 // pred_region
      _
    $region17: #{tpu_custom_call.1} parent=1 // pred_fallthru
      _
    // Predicated region
    $region18: #{tpu_custom_call.1} parent=1 // pred_check
      _
    $region19: #{tpu_custom_call.1} parent=1 // pred_check_branch
      %32 = sbr.rel (0) target = $region21
    $region20: #{tpu_custom_call.1} parent=1 // pred_region
      _
    $region21: #{tpu_custom_call.1} parent=1 // pred_fallthru
      _
    // Predicated region
    $region22: #{tpu_custom_call.1} parent=1 // pred_check
      _
    $region23: #{tpu_custom_call.1} parent=1 // pred_check_branch
      %34 = sbr.rel (0) target = $region25
    $region24: #{tpu_custom_call.1} parent=1 // pred_region
      _
    $region25: #{tpu_custom_call.1} parent=1 // pred_fallthru
      _
    // Predicated region
    $region26: #{tpu_custom_call.1} parent=1 // pred_check
      _
    $region27: #{tpu_custom_call.1} parent=1 // pred_check_branch
      %36 = sbr.rel (0) target = $region29
    $region28: #{tpu_custom_call.1} parent=1 // pred_region
      _
    $region29: #{tpu_custom_call.1} parent=1 // pred_fallthru
      _
    // Predicated region
    $region30: #{tpu_custom_call.1} parent=1 // pred_check
      _
    $region31: #{tpu_custom_call.1} parent=1 // pred_check_branch
      %38 = sbr.rel (0) target = $region33
    $region32: #{tpu_custom_call.1} parent=1 // pred_region
      _
    $region33: #{tpu_custom_call.1} parent=1 // pred_fallthru
      _
    // Predicated region
    $region34: #{tpu_custom_call.1} parent=1 // pred_check
      _
    $region35: #{tpu_custom_call.1} parent=1 // pred_check_branch
      %40 = sbr.rel (0) target = $region37
    $region36: #{tpu_custom_call.1} parent=1 // pred_region
      %41 = dma.done [#allocation4], 16
    $region37: #{tpu_custom_call.1} parent=1 // pred_fallthru
      _
    %42 = sfence
    %v43 = vld [vmem:[%s1] sm:$0xff]
    %v44 = vld [vmem:[%s1 + $0x8] sm:$0xff]
    %s45 = sld [smem:[#allocation2]]
    %v46 = vstv %s45
    %vm47 = vcmp.lt.f32.partialorder %v43, %v46
    %vm48 = vcmp.lt.f32.partialorder %v44, %v46
    %s49 = sld [smem:[#allocation2 + $0x3]]
    %v50 = vstv %s49
    %vm51 = vcmp.gt.f32.partialorder %v43, %v50
    %vm52 = vcmp.gt.f32.partialorder %v44, %v50
    %vm53 = vmor %vm47, %vm51
    %vm54 = vmor %vm48, %vm52
    %s55 = sld [smem:[#allocation2 + $0x1]]
    %v56 = vstv %s55
    %vm57 = vcmp.lt.f32.partialorder %v43, %v56
    %vm58 = vcmp.lt.f32.partialorder %v44, %v56
    %v59 = vsel %vm57, 1, 0
    %v60 = vsel %vm58, 1, 0
    %v61 = vrot.slane %v59, 5
    %v62 = vrot.slane %v61, 4
    %v63 = vrot.slane %v60, 5
    %v64 = vrot.slane %v63, 4
    %vm65 = vcmp.ne.s32.totalorder %v62, 0
    %vm66 = vcmp.ne.s32.totalorder %v64, 0
    %vm67 = vmor %vm53, %vm65
    %vm68 = vmor %vm54, %vm66
    %s69 = sld [smem:[#allocation2 + $0x4]]
    %v70 = vstv %s69
    %vm71 = vcmp.gt.f32.partialorder %v43, %v70
    %vm72 = vcmp.gt.f32.partialorder %v44, %v70
    %v73 = vsel %vm71, 1, 0
    %v74 = vsel %vm72, 1, 0
    %v75 = vrot.slane %v73, 5
    %v76 = vrot.slane %v75, 4
    %v77 = vrot.slane %v74, 5
    %v78 = vrot.slane %v77, 4
    %vm79 = vcmp.ne.s32.totalorder %v76, 0
    %vm80 = vcmp.ne.s32.totalorder %v78, 0
    %vm81 = vmor %vm67, %vm79
    %vm82 = vmor %vm68, %vm80
    %s83 = sld [smem:[#allocation2 + $0x2]]
    %v84 = vstv %s83
    %vm85 = vcmp.lt.f32.partialorder %v43, %v84
    %vm86 = vcmp.lt.f32.partialorder %v44, %v84
    %v87 = vsel %vm85, 1, 0
    %v88 = vsel %vm86, 1, 0
    %v89 = vrot.slane %v87, 6
    %v90 = vrot.slane %v89, 4
    %v91 = vrot.slane %v88, 6
    %v92 = vrot.slane %v91, 4
    %vm93 = vcmp.ne.s32.totalorder %v90, 0
    %vm94 = vcmp.ne.s32.totalorder %v92, 0
    %vm95 = vmor %vm81, %vm93
    %vm96 = vmor %vm82, %vm94
    %s97 = sld [smem:[#allocation2 + $0x5]]
    %v98 = vstv %s97
    %vm99 = vcmp.gt.f32.partialorder %v43, %v98
    %vm100 = vcmp.gt.f32.partialorder %v44, %v98
    %v101 = vsel %vm99, 1, 0
    %v102 = vsel %vm100, 1, 0
    %v103 = vrot.slane %v101, 6
    %v104 = vrot.slane %v103, 4
    %v105 = vrot.slane %v102, 6
    %v106 = vrot.slane %v105, 4
    %vm107 = vcmp.ne.s32.totalorder %v104, 0
    %vm108 = vcmp.ne.s32.totalorder %v106, 0
    %vm109 = vmor %vm95, %vm107
    %vm110 = vmor %vm96, %vm108
    %v111 = vld [vmem:[%s2] sm:$0xff]
    %v112 = vld [vmem:[%s2 + $0x8] sm:$0xff]
    %v113 = vld [vmem:[%s2 + $0x10] sm:$0xff]
    %v114 = vld [vmem:[%s2 + $0x18] sm:$0xff]
    %116 = vset.pattern.permute.xlu0 0
    %117 = vperm.xlu0 %116, %v111
    %v118 = vpop.permute.xlu0 %117
    %121 = vset.pattern.permute.xlu0 0
    %122 = vperm.xlu0 %121, %v112
    %v123 = vpop.permute.xlu0 %122
    %126 = vset.pattern.permute.xlu0 0
    %127 = vperm.xlu0 %126, %v113
    %v128 = vpop.permute.xlu0 %127
    %131 = vset.pattern.permute.xlu0 0
    %132 = vperm.xlu0 %131, %v114
    %v133 = vpop.permute.xlu0 %132
    %v137 = vlaneseq
    %v138 = vshrl.u32 %v137, 7
    %v139 = vsub.s32 0, %v138
    %v140 = vrot.slane %v43, %v139
    %v141 = vlaneseq
    %v142 = vshrl.u32 %v141, 7
    %v143 = vsub.s32 4, %v142
    %v144 = vrot.slane %v43, %v143
    %v145 = vlaneseq
    %v146 = vshrl.u32 %v145, 7
    %v147 = vsub.s32 0, %v146
    %v148 = vrot.slane %v44, %v147
    %v149 = vlaneseq
    %v150 = vshrl.u32 %v149, 7
    %v151 = vsub.s32 4, %v150
    %v152 = vrot.slane %v44, %v151
    %v157 = vlaneseq
    %v158 = vshrl.u32 %v157, 7
    %v159 = vsub.s32 0, %v158
    %v160 = vrot.slane %v140, %v159
    %v161 = vlaneseq
    %v162 = vshrl.u32 %v161, 7
    %v163 = vsub.s32 0, %v162
    %v164 = vrot.slane %v144, %v163
    %v165 = vlaneseq
    %v166 = vshrl.u32 %v165, 7
    %v167 = vsub.s32 0, %v166
    %v168 = vrot.slane %v148, %v167
    %v169 = vlaneseq
    %v170 = vshrl.u32 %v169, 7
    %v171 = vsub.s32 0, %v170
    %v172 = vrot.slane %v152, %v171
    %v173 = vmul.f32 %v118, %v160
    %v174 = vmul.f32 %v118, %v164
    %v175 = vmul.f32 %v118, %v168
    %v176 = vmul.f32 %v118, %v172
    %v177 = vmul.f32 %v123, %v160
    %v178 = vmul.f32 %v123, %v164
    %v179 = vmul.f32 %v123, %v168
    %v180 = vmul.f32 %v123, %v172
    %v181 = vmul.f32 %v128, %v160
    %v182 = vmul.f32 %v128, %v164
    %v183 = vmul.f32 %v128, %v168
    %v184 = vmul.f32 %v128, %v172
    %v185 = vmul.f32 %v133, %v160
    %v186 = vmul.f32 %v133, %v164
    %v187 = vmul.f32 %v133, %v168
    %v188 = vmul.f32 %v133, %v172
    %189 = vset.pattern.permute.xlu0 1
    %190 = vperm.xlu0 %189, %v111
    %v191 = vpop.permute.xlu0 %190
    %193 = vset.pattern.permute.xlu0 1
    %194 = vperm.xlu0 %193, %v112
    %v195 = vpop.permute.xlu0 %194
    %197 = vset.pattern.permute.xlu0 1
    %198 = vperm.xlu0 %197, %v113
    %v199 = vpop.permute.xlu0 %198
    %201 = vset.pattern.permute.xlu0 1
    %202 = vperm.xlu0 %201, %v114
    %v203 = vpop.permute.xlu0 %202
    %v205 = vlaneseq
    %v206 = vshrl.u32 %v205, 7
    %v207 = vsub.s32 1, %v206
    %v208 = vrot.slane %v43, %v207
    %v209 = vlaneseq
    %v210 = vshrl.u32 %v209, 7
    %v211 = vsub.s32 5, %v210
    %v212 = vrot.slane %v43, %v211
    %v213 = vlaneseq
    %v214 = vshrl.u32 %v213, 7
    %v215 = vsub.s32 1, %v214
    %v216 = vrot.slane %v44, %v215
    %v217 = vlaneseq
    %v218 = vshrl.u32 %v217, 7
    %v219 = vsub.s32 5, %v218
    %v220 = vrot.slane %v44, %v219
    %v225 = vlaneseq
    %v226 = vshrl.u32 %v225, 7
    %v227 = vsub.s32 1, %v226
    %v228 = vrot.slane %v208, %v227
    %v229 = vlaneseq
    %v230 = vshrl.u32 %v229, 7
    %v231 = vsub.s32 1, %v230
    %v232 = vrot.slane %v212, %v231
    %v233 = vlaneseq
    %v234 = vshrl.u32 %v233, 7
    %v235 = vsub.s32 1, %v234
    %v236 = vrot.slane %v216, %v235
    %v237 = vlaneseq
    %v238 = vshrl.u32 %v237, 7
    %v239 = vsub.s32 1, %v238
    %v240 = vrot.slane %v220, %v239
    %v241 = vmul.f32 %v191, %v228
    %v242 = vmul.f32 %v191, %v232
    %v243 = vmul.f32 %v191, %v236
    %v244 = vmul.f32 %v191, %v240
    %v245 = vmul.f32 %v195, %v228
    %v246 = vmul.f32 %v195, %v232
    %v247 = vmul.f32 %v195, %v236
    %v248 = vmul.f32 %v195, %v240
    %v249 = vmul.f32 %v199, %v228
    %v250 = vmul.f32 %v199, %v232
    %v251 = vmul.f32 %v199, %v236
    %v252 = vmul.f32 %v199, %v240
    %v253 = vmul.f32 %v203, %v228
    %v254 = vmul.f32 %v203, %v232
    %v255 = vmul.f32 %v203, %v236
    %v256 = vmul.f32 %v203, %v240
    %v257 = vadd.f32 %v173, %v241
    %v258 = vadd.f32 %v174, %v242
    %v259 = vadd.f32 %v175, %v243
    %v260 = vadd.f32 %v176, %v244
    %v261 = vadd.f32 %v177, %v245
    %v262 = vadd.f32 %v178, %v246
    %v263 = vadd.f32 %v179, %v247
    %v264 = vadd.f32 %v180, %v248
    %v265 = vadd.f32 %v181, %v249
    %v266 = vadd.f32 %v182, %v250
    %v267 = vadd.f32 %v183, %v251
    %v268 = vadd.f32 %v184, %v252
    %v269 = vadd.f32 %v185, %v253
    %v270 = vadd.f32 %v186, %v254
    %v271 = vadd.f32 %v187, %v255
    %v272 = vadd.f32 %v188, %v256
    %273 = vset.pattern.permute.xlu0 2
    %274 = vperm.xlu0 %273, %v111
    %v275 = vpop.permute.xlu0 %274
    %277 = vset.pattern.permute.xlu0 2
    %278 = vperm.xlu0 %277, %v112
    %v279 = vpop.permute.xlu0 %278
    %281 = vset.pattern.permute.xlu0 2
    %282 = vperm.xlu0 %281, %v113
    %v283 = vpop.permute.xlu0 %282
    %285 = vset.pattern.permute.xlu0 2
    %286 = vperm.xlu0 %285, %v114
    %v287 = vpop.permute.xlu0 %286
    %v289 = vlaneseq
    %v290 = vshrl.u32 %v289, 7
    %v291 = vsub.s32 2, %v290
    %v292 = vrot.slane %v43, %v291
    %v293 = vlaneseq
    %v294 = vshrl.u32 %v293, 7
    %v295 = vsub.s32 6, %v294
    %v296 = vrot.slane %v43, %v295
    %v297 = vlaneseq
    %v298 = vshrl.u32 %v297, 7
    %v299 = vsub.s32 2, %v298
    %v300 = vrot.slane %v44, %v299
    %v301 = vlaneseq
    %v302 = vshrl.u32 %v301, 7
    %v303 = vsub.s32 6, %v302
    %v304 = vrot.slane %v44, %v303
    %v309 = vlaneseq
    %v310 = vshrl.u32 %v309, 7
    %v311 = vsub.s32 2, %v310
    %v312 = vrot.slane %v292, %v311
    %v313 = vlaneseq
    %v314 = vshrl.u32 %v313, 7
    %v315 = vsub.s32 2, %v314
    %v316 = vrot.slane %v296, %v315
    %v317 = vlaneseq
    %v318 = vshrl.u32 %v317, 7
    %v319 = vsub.s32 2, %v318
    %v320 = vrot.slane %v300, %v319
    %v321 = vlaneseq
    %v322 = vshrl.u32 %v321, 7
    %v323 = vsub.s32 2, %v322
    %v324 = vrot.slane %v304, %v323
    %v325 = vmul.f32 %v275, %v312
    %v326 = vmul.f32 %v275, %v316
    %v327 = vmul.f32 %v275, %v320
    %v328 = vmul.f32 %v275, %v324
    %v329 = vmul.f32 %v279, %v312
    %v330 = vmul.f32 %v279, %v316
    %v331 = vmul.f32 %v279, %v320
    %v332 = vmul.f32 %v279, %v324
    %v333 = vmul.f32 %v283, %v312
    %v334 = vmul.f32 %v283, %v316
    %v335 = vmul.f32 %v283, %v320
    %v336 = vmul.f32 %v283, %v324
    %v337 = vmul.f32 %v287, %v312
    %v338 = vmul.f32 %v287, %v316
    %v339 = vmul.f32 %v287, %v320
    %v340 = vmul.f32 %v287, %v324
    %v341 = vadd.f32 %v257, %v325
    %v342 = vadd.f32 %v258, %v326
    %v343 = vadd.f32 %v259, %v327
    %v344 = vadd.f32 %v260, %v328
    %v345 = vadd.f32 %v261, %v329
    %v346 = vadd.f32 %v262, %v330
    %v347 = vadd.f32 %v263, %v331
    %v348 = vadd.f32 %v264, %v332
    %v349 = vadd.f32 %v265, %v333
    %v350 = vadd.f32 %v266, %v334
    %v351 = vadd.f32 %v267, %v335
    %v352 = vadd.f32 %v268, %v336
    %v353 = vadd.f32 %v269, %v337
    %v354 = vadd.f32 %v270, %v338
    %v355 = vadd.f32 %v271, %v339
    %v356 = vadd.f32 %v272, %v340
    %357 = vset.pattern.permute.xlu0 3
    %358 = vperm.xlu0 %357, %v111
    %v359 = vpop.permute.xlu0 %358
    %361 = vset.pattern.permute.xlu0 3
    %362 = vperm.xlu0 %361, %v112
    %v363 = vpop.permute.xlu0 %362
    %365 = vset.pattern.permute.xlu0 3
    %366 = vperm.xlu0 %365, %v113
    %v367 = vpop.permute.xlu0 %366
    %369 = vset.pattern.permute.xlu0 3
    %370 = vperm.xlu0 %369, %v114
    %v371 = vpop.permute.xlu0 %370
    %v373 = vlaneseq
    %v374 = vshrl.u32 %v373, 7
    %v375 = vsub.s32 3, %v374
    %v376 = vrot.slane %v43, %v375
    %v377 = vlaneseq
    %v378 = vshrl.u32 %v377, 7
    %v379 = vsub.s32 7, %v378
    %v380 = vrot.slane %v43, %v379
    %v381 = vlaneseq
    %v382 = vshrl.u32 %v381, 7
    %v383 = vsub.s32 3, %v382
    %v384 = vrot.slane %v44, %v383
    %v385 = vlaneseq
    %v386 = vshrl.u32 %v385, 7
    %v387 = vsub.s32 7, %v386
    %v388 = vrot.slane %v44, %v387
    %v393 = vlaneseq
    %v394 = vshrl.u32 %v393, 7
    %v395 = vsub.s32 3, %v394
    %v396 = vrot.slane %v376, %v395
    %v397 = vlaneseq
    %v398 = vshrl.u32 %v397, 7
    %v399 = vsub.s32 3, %v398
    %v400 = vrot.slane %v380, %v399
    %v401 = vlaneseq
    %v402 = vshrl.u32 %v401, 7
    %v403 = vsub.s32 3, %v402
    %v404 = vrot.slane %v384, %v403
    %v405 = vlaneseq
    %v406 = vshrl.u32 %v405, 7
    %v407 = vsub.s32 3, %v406
    %v408 = vrot.slane %v388, %v407
    %v409 = vmul.f32 %v359, %v396
    %v410 = vmul.f32 %v359, %v400
    %v411 = vmul.f32 %v359, %v404
    %v412 = vmul.f32 %v359, %v408
    %v413 = vmul.f32 %v363, %v396
    %v414 = vmul.f32 %v363, %v400
    %v415 = vmul.f32 %v363, %v404
    %v416 = vmul.f32 %v363, %v408
    %v417 = vmul.f32 %v367, %v396
    %v418 = vmul.f32 %v367, %v400
    %v419 = vmul.f32 %v367, %v404
    %v420 = vmul.f32 %v367, %v408
    %v421 = vmul.f32 %v371, %v396
    %v422 = vmul.f32 %v371, %v400
    %v423 = vmul.f32 %v371, %v404
    %v424 = vmul.f32 %v371, %v408
    %v425 = vadd.f32 %v341, %v409
    %v426 = vadd.f32 %v342, %v410
    %v427 = vadd.f32 %v343, %v411
    %v428 = vadd.f32 %v344, %v412
    %v429 = vadd.f32 %v345, %v413
    %v430 = vadd.f32 %v346, %v414
    %v431 = vadd.f32 %v347, %v415
    %v432 = vadd.f32 %v348, %v416
    %v433 = vadd.f32 %v349, %v417
    %v434 = vadd.f32 %v350, %v418
    %v435 = vadd.f32 %v351, %v419
    %v436 = vadd.f32 %v352, %v420
    %v437 = vadd.f32 %v353, %v421
    %v438 = vadd.f32 %v354, %v422
    %v439 = vadd.f32 %v355, %v423
    %v440 = vadd.f32 %v356, %v424
    %v441 = vld [vmem:[%s3] sm:$0xff]
    %v442 = vld [vmem:[%s3 + $0x8] sm:$0xff]
    %v443 = vld [vmem:[%s3 + $0x10] sm:$0xff]
    %v444 = vld [vmem:[%s3 + $0x18] sm:$0xff]
    %446 = vset.pattern.permute.xlu0 0
    %447 = vperm.xlu0 %446, %v441
    %v448 = vpop.permute.xlu0 %447
    %451 = vset.pattern.permute.xlu0 0
    %452 = vperm.xlu0 %451, %v442
    %v453 = vpop.permute.xlu0 %452
    %456 = vset.pattern.permute.xlu0 0
    %457 = vperm.xlu0 %456, %v443
    %v458 = vpop.permute.xlu0 %457
    %461 = vset.pattern.permute.xlu0 0
    %462 = vperm.xlu0 %461, %v444
    %v463 = vpop.permute.xlu0 %462
    %v465 = vadd.f32 %v425, %v448
    %v466 = vadd.f32 %v426, %v448
    %v467 = vadd.f32 %v427, %v448
    %v468 = vadd.f32 %v428, %v448
    %v469 = vadd.f32 %v429, %v453
    %v470 = vadd.f32 %v430, %v453
    %v471 = vadd.f32 %v431, %v453
    %v472 = vadd.f32 %v432, %v453
    %v473 = vadd.f32 %v433, %v458
    %v474 = vadd.f32 %v434, %v458
    %v475 = vadd.f32 %v435, %v458
    %v476 = vadd.f32 %v436, %v458
    %v477 = vadd.f32 %v437, %v463
    %v478 = vadd.f32 %v438, %v463
    %v479 = vadd.f32 %v439, %v463
    %v480 = vadd.f32 %v440, %v463
    %v481 = vmax.f32 %v465, 0.0
    %v482 = vmax.f32 %v466, 0.0
    %v483 = vmax.f32 %v467, 0.0
    %v484 = vmax.f32 %v468, 0.0
    %v485 = vmax.f32 %v469, 0.0
    %v486 = vmax.f32 %v470, 0.0
    %v487 = vmax.f32 %v471, 0.0
    %v488 = vmax.f32 %v472, 0.0
    %v489 = vmax.f32 %v473, 0.0
    %v490 = vmax.f32 %v474, 0.0
    %v491 = vmax.f32 %v475, 0.0
    %v492 = vmax.f32 %v476, 0.0
    %v493 = vmax.f32 %v477, 0.0
    %v494 = vmax.f32 %v478, 0.0
    %v495 = vmax.f32 %v479, 0.0
    %v496 = vmax.f32 %v480, 0.0
    %v497 = vld [vmem:[%s4] sm:$0xff]
    %v498 = vld [vmem:[%s4 + $0x8] sm:$0xff]
    %v499 = vld [vmem:[%s4 + $0x10] sm:$0xff]
    %v500 = vld [vmem:[%s4 + $0x18] sm:$0xff]
    %v501 = vld [vmem:[%s5] sm:$0xff]
    %v502 = vld [vmem:[%s5 + $0x8] sm:$0xff]
    %v503 = vld [vmem:[%s5 + $0x10] sm:$0xff]
    %v504 = vld [vmem:[%s5 + $0x18] sm:$0xff]
    %506 = vset.pattern.permute.xlu0 0
    %507 = vperm.xlu0 %506, %v501
    %v508 = vpop.permute.xlu0 %507
    %511 = vset.pattern.permute.xlu0 0
    %512 = vperm.xlu0 %511, %v502
    %v513 = vpop.permute.xlu0 %512
    %516 = vset.pattern.permute.xlu0 0
    %517 = vperm.xlu0 %516, %v503
    %v518 = vpop.permute.xlu0 %517
    %521 = vset.pattern.permute.xlu0 0
    %522 = vperm.xlu0 %521, %v504
    %v523 = vpop.permute.xlu0 %522
    %vm525 = vcmask 261120
    %v527 = vsel %vm525, %v497, 0
    %v530 = vsel %vm525, %v498, 0
    %v533 = vsel %vm525, %v499, 0
    %v536 = vsel %vm525, %v500, 0
    %538 = vmatprep.subr.mxu0 0.0
    %539 = vmatpush1.msra.mxu0 0.0
    %540 = vmatprep.subr.mxu0 0.0
    %541 = vmatpush1.msra.mxu0 0.0
    %542 = vmatprep.subr.mxu0 0.0
    %543 = vmatpush1.msra.mxu0 0.0
    %544 = vmatprep.subr.mxu0 0.0
    %545 = vmatpush1.msra.mxu0 0.0
    %546 = vmatprep.subr.mxu0 0.0
    %547 = vmatpush1.msra.mxu0 0.0
    %548 = vmatprep.subr.mxu0 0.0
    %549 = vmatpush1.msra.mxu0 0.0
    %550 = vmatprep.subr.mxu0 0.0
    %551 = vmatpush1.msra.mxu0 0.0
    %552 = vmatprep.subr.mxu0 0.0
    %553 = vmatpush1.msra.mxu0 0.0
    %554 = vmatprep.subr.mxu0 0.0
    %555 = vmatpush1.msra.mxu0 0.0
    %556 = vmatprep.subr.mxu0 0.0
    %557 = vmatpush1.msra.mxu0 0.0
    %558 = vmatprep.subr.mxu0 0.0
    %559 = vmatpush1.msra.mxu0 0.0
    %560 = vmatprep.subr.mxu0 0.0
    %561 = vmatpush1.msra.mxu0 0.0
    %562 = vmatprep.subr.mxu0 %v494
    %563 = vmatpush1.msra.mxu0 %v493
    %564 = vmatprep.subr.mxu0 %v490
    %565 = vmatpush1.msra.mxu0 %v489
    %566 = vmatprep.subr.mxu0 %v486
    %567 = vmatpush1.msra.mxu0 %v485
    %568 = vmatprep.subr.mxu0 %v482
    %569 = vmatpush1.msra.mxu0 %v481
    %570 = vmatprep.subr.mxu0 0.0
    %571 = vmatpush2.msra.mxu0 0.0
    %572 = vmatprep.subr.mxu0 0.0
    %573 = vmatpush2.msra.mxu0 0.0
    %574 = vmatprep.subr.mxu0 0.0
    %575 = vmatpush2.msra.mxu0 0.0
    %576 = vmatprep.subr.mxu0 0.0
    %577 = vmatpush2.msra.mxu0 0.0
    %578 = vmatprep.subr.mxu0 0.0
    %579 = vmatpush2.msra.mxu0 0.0
    %580 = vmatprep.subr.mxu0 0.0
    %581 = vmatpush2.msra.mxu0 0.0
    %582 = vmatprep.subr.mxu0 0.0
    %583 = vmatpush2.msra.mxu0 0.0
    %584 = vmatprep.subr.mxu0 0.0
    %585 = vmatpush2.msra.mxu0 0.0
    %586 = vmatprep.subr.mxu0 0.0
    %587 = vmatpush2.msra.mxu0 0.0
    %588 = vmatprep.subr.mxu0 0.0
    %589 = vmatpush2.msra.mxu0 0.0
    %590 = vmatprep.subr.mxu0 0.0
    %591 = vmatpush2.msra.mxu0 0.0
    %592 = vmatprep.subr.mxu0 0.0
    %593 = vmatpush2.msra.mxu0 0.0
    %594 = vmatprep.subr.mxu0 0.0
    %595 = vmatpush2.msra.mxu0 0.0
    %596 = vmatprep.subr.mxu0 0.0
    %597 = vmatpush2.msra.mxu0 0.0
    %598 = vmatprep.subr.mxu0 0.0
    %599 = vmatpush2.msra.mxu0 0.0
    %600 = vmatprep.subr.mxu0 0.0
    %601 = vmatpush2.msra.mxu0 0.0
    %602 = vmatprep.mubr.f32.mxu0 0.0
    %603 = vmatmul.mubr.f32.gmra.mxu0 %v527
    %v604 = vpop.f32.mrf.mxu0
    %v605 = vadd.f32 %v508, %v604
    %v606 = vpop.f32.mrf.mxu0
    %v607 = vadd.f32 %v508, %v606
    %608 = vmatprep.mubr.f32.mxu0 0.0
    %609 = vmatmul.mubr.f32.gmra.mxu0 %v530
    %v610 = vpop.f32.mrf.mxu0
    %v611 = vadd.f32 %v513, %v610
    %v612 = vpop.f32.mrf.mxu0
    %v613 = vadd.f32 %v513, %v612
    %614 = vmatprep.mubr.f32.mxu0 0.0
    %615 = vmatmul.mubr.f32.gmra.mxu0 %v533
    %v616 = vpop.f32.mrf.mxu0
    %v617 = vadd.f32 %v518, %v616
    %v618 = vpop.f32.mrf.mxu0
    %v619 = vadd.f32 %v518, %v618
    %620 = vmatprep.mubr.f32.mxu0 0.0
    %621 = vmatmul.mubr.f32.gmra.mxu0 %v536
    %v622 = vpop.f32.mrf.mxu0
    %v623 = vadd.f32 %v523, %v622
    %v624 = vpop.f32.mrf.mxu0
    %v625 = vadd.f32 %v523, %v624
    %626 = vdwg.mxu0
    %627 = vmatprep.subr.mxu0 0.0
    %628 = vmatpush1.msra.mxu0 0.0
    %629 = vmatprep.subr.mxu0 0.0
    %630 = vmatpush1.msra.mxu0 0.0
    %631 = vmatprep.subr.mxu0 0.0
    %632 = vmatpush1.msra.mxu0 0.0
    %633 = vmatprep.subr.mxu0 0.0
    %634 = vmatpush1.msra.mxu0 0.0
    %635 = vmatprep.subr.mxu0 0.0
    %636 = vmatpush1.msra.mxu0 0.0
    %637 = vmatprep.subr.mxu0 0.0
    %638 = vmatpush1.msra.mxu0 0.0
    %639 = vmatprep.subr.mxu0 0.0
    %640 = vmatpush1.msra.mxu0 0.0
    %641 = vmatprep.subr.mxu0 0.0
    %642 = vmatpush1.msra.mxu0 0.0
    %643 = vmatprep.subr.mxu0 0.0
    %644 = vmatpush1.msra.mxu0 0.0
    %645 = vmatprep.subr.mxu0 0.0
    %646 = vmatpush1.msra.mxu0 0.0
    %647 = vmatprep.subr.mxu0 0.0
    %648 = vmatpush1.msra.mxu0 0.0
    %649 = vmatprep.subr.mxu0 0.0
    %650 = vmatpush1.msra.mxu0 0.0
    %651 = vmatprep.subr.mxu0 %v496
    %652 = vmatpush1.msra.mxu0 %v495
    %653 = vmatprep.subr.mxu0 %v492
    %654 = vmatpush1.msra.mxu0 %v491
    %655 = vmatprep.subr.mxu0 %v488
    %656 = vmatpush1.msra.mxu0 %v487
    %657 = vmatprep.subr.mxu0 %v484
    %658 = vmatpush1.msra.mxu0 %v483
    %659 = vmatprep.subr.mxu0 0.0
    %660 = vmatpush2.msra.mxu0 0.0
    %661 = vmatprep.subr.mxu0 0.0
    %662 = vmatpush2.msra.mxu0 0.0
    %663 = vmatprep.subr.mxu0 0.0
    %664 = vmatpush2.msra.mxu0 0.0
    %665 = vmatprep.subr.mxu0 0.0
    %666 = vmatpush2.msra.mxu0 0.0
    %667 = vmatprep.subr.mxu0 0.0
    %668 = vmatpush2.msra.mxu0 0.0
    %669 = vmatprep.subr.mxu0 0.0
    %670 = vmatpush2.msra.mxu0 0.0
    %671 = vmatprep.subr.mxu0 0.0
    %672 = vmatpush2.msra.mxu0 0.0
    %673 = vmatprep.subr.mxu0 0.0
    %674 = vmatpush2.msra.mxu0 0.0
    %675 = vmatprep.subr.mxu0 0.0
    %676 = vmatpush2.msra.mxu0 0.0
    %677 = vmatprep.subr.mxu0 0.0
    %678 = vmatpush2.msra.mxu0 0.0
    %679 = vmatprep.subr.mxu0 0.0
    %680 = vmatpush2.msra.mxu0 0.0
    %681 = vmatprep.subr.mxu0 0.0
    %682 = vmatpush2.msra.mxu0 0.0
    %683 = vmatprep.subr.mxu0 0.0
    %684 = vmatpush2.msra.mxu0 0.0
    %685 = vmatprep.subr.mxu0 0.0
    %686 = vmatpush2.msra.mxu0 0.0
    %687 = vmatprep.subr.mxu0 0.0
    %688 = vmatpush2.msra.mxu0 0.0
    %689 = vmatprep.subr.mxu0 0.0
    %690 = vmatpush2.msra.mxu0 0.0
    %691 = vmatprep.mubr.f32.mxu0 0.0
    %692 = vmatmul.mubr.f32.gmra.mxu0 %v527
    %v693 = vpop.f32.mrf.mxu0
    %v694 = vadd.f32 %v508, %v693
    %v695 = vpop.f32.mrf.mxu0
    %v696 = vadd.f32 %v508, %v695
    %697 = vmatprep.mubr.f32.mxu0 0.0
    %698 = vmatmul.mubr.f32.gmra.mxu0 %v530
    %v699 = vpop.f32.mrf.mxu0
    %v700 = vadd.f32 %v513, %v699
    %v701 = vpop.f32.mrf.mxu0
    %v702 = vadd.f32 %v513, %v701
    %703 = vmatprep.mubr.f32.mxu0 0.0
    %704 = vmatmul.mubr.f32.gmra.mxu0 %v533
    %v705 = vpop.f32.mrf.mxu0
    %v706 = vadd.f32 %v518, %v705
    %v707 = vpop.f32.mrf.mxu0
    %v708 = vadd.f32 %v518, %v707
    %709 = vmatprep.mubr.f32.mxu0 0.0
    %710 = vmatmul.mubr.f32.gmra.mxu0 %v536
    %v711 = vpop.f32.mrf.mxu0
    %v712 = vadd.f32 %v523, %v711
    %v713 = vpop.f32.mrf.mxu0
    %v714 = vadd.f32 %v523, %v713
    %715 = vdwg.mxu0
    %v716 = vmax.f32 %v605, 0.0
    %v717 = vmax.f32 %v607, 0.0
    %v718 = vmax.f32 %v694, 0.0
    %v719 = vmax.f32 %v696, 0.0
    %v720 = vmax.f32 %v611, 0.0
    %v721 = vmax.f32 %v613, 0.0
    %v722 = vmax.f32 %v700, 0.0
    %v723 = vmax.f32 %v702, 0.0
    %v724 = vmax.f32 %v617, 0.0
    %v725 = vmax.f32 %v619, 0.0
    %v726 = vmax.f32 %v706, 0.0
    %v727 = vmax.f32 %v708, 0.0
    %v728 = vmax.f32 %v623, 0.0
    %v729 = vmax.f32 %v625, 0.0
    %v730 = vmax.f32 %v712, 0.0
    %v731 = vmax.f32 %v714, 0.0
    %v732 = vld [vmem:[%s6] sm:$0x7]
    %v733 = vld [vmem:[%s7] sm:$0x7]
    %735 = vset.pattern.permute.xlu0 0
    %736 = vperm.xlu0 %735, %v733
    %v737 = vpop.permute.xlu0 %736
    %v740 = vsel %vm525, %v732, 0
    %742 = vmatprep.subr.mxu0 0.0
    %743 = vmatpush1.msra.mxu0 0.0
    %744 = vmatprep.subr.mxu0 0.0
    %745 = vmatpush1.msra.mxu0 0.0
    %746 = vmatprep.subr.mxu0 0.0
    %747 = vmatpush1.msra.mxu0 0.0
    %748 = vmatprep.subr.mxu0 0.0
    %749 = vmatpush1.msra.mxu0 0.0
    %750 = vmatprep.subr.mxu0 0.0
    %751 = vmatpush1.msra.mxu0 0.0
    %752 = vmatprep.subr.mxu0 0.0
    %753 = vmatpush1.msra.mxu0 0.0
    %754 = vmatprep.subr.mxu0 0.0
    %755 = vmatpush1.msra.mxu0 0.0
    %756 = vmatprep.subr.mxu0 0.0
    %757 = vmatpush1.msra.mxu0 0.0
    %758 = vmatprep.subr.mxu0 0.0
    %759 = vmatpush1.msra.mxu0 0.0
    %760 = vmatprep.subr.mxu0 0.0
    %761 = vmatpush1.msra.mxu0 0.0
    %762 = vmatprep.subr.mxu0 0.0
    %763 = vmatpush1.msra.mxu0 0.0
    %764 = vmatprep.subr.mxu0 0.0
    %765 = vmatpush1.msra.mxu0 0.0
    %766 = vmatprep.subr.mxu0 %v729
    %767 = vmatpush1.msra.mxu0 %v728
    %768 = vmatprep.subr.mxu0 %v725
    %769 = vmatpush1.msra.mxu0 %v724
    %770 = vmatprep.subr.mxu0 %v721
    %771 = vmatpush1.msra.mxu0 %v720
    %772 = vmatprep.subr.mxu0 %v717
    %773 = vmatpush1.msra.mxu0 %v716
    %774 = vmatprep.subr.mxu0 0.0
    %775 = vmatpush2.msra.mxu0 0.0
    %776 = vmatprep.subr.mxu0 0.0
    %777 = vmatpush2.msra.mxu0 0.0
    %778 = vmatprep.subr.mxu0 0.0
    %779 = vmatpush2.msra.mxu0 0.0
    %780 = vmatprep.subr.mxu0 0.0
    %781 = vmatpush2.msra.mxu0 0.0
    %782 = vmatprep.subr.mxu0 0.0
    %783 = vmatpush2.msra.mxu0 0.0
    %784 = vmatprep.subr.mxu0 0.0
    %785 = vmatpush2.msra.mxu0 0.0
    %786 = vmatprep.subr.mxu0 0.0
    %787 = vmatpush2.msra.mxu0 0.0
    %788 = vmatprep.subr.mxu0 0.0
    %789 = vmatpush2.msra.mxu0 0.0
    %790 = vmatprep.subr.mxu0 0.0
    %791 = vmatpush2.msra.mxu0 0.0
    %792 = vmatprep.subr.mxu0 0.0
    %793 = vmatpush2.msra.mxu0 0.0
    %794 = vmatprep.subr.mxu0 0.0
    %795 = vmatpush2.msra.mxu0 0.0
    %796 = vmatprep.subr.mxu0 0.0
    %797 = vmatpush2.msra.mxu0 0.0
    %798 = vmatprep.subr.mxu0 0.0
    %799 = vmatpush2.msra.mxu0 0.0
    %800 = vmatprep.subr.mxu0 0.0
    %801 = vmatpush2.msra.mxu0 0.0
    %802 = vmatprep.subr.mxu0 0.0
    %803 = vmatpush2.msra.mxu0 0.0
    %804 = vmatprep.subr.mxu0 0.0
    %805 = vmatpush2.msra.mxu0 0.0
    %806 = vmatprep.mubr.f32.mxu0 0.0
    %807 = vmatmul.mubr.f32.gmra.mxu0 %v740
    %v808 = vpop.f32.mrf.mxu0
    %v809 = vadd.f32 %v737, %v808
    %v810 = vpop.f32.mrf.mxu0
    %v811 = vadd.f32 %v737, %v810
    %812 = vdwg.mxu0
    %813 = vmatprep.subr.mxu0 0.0
    %814 = vmatpush1.msra.mxu0 0.0
    %815 = vmatprep.subr.mxu0 0.0
    %816 = vmatpush1.msra.mxu0 0.0
    %817 = vmatprep.subr.mxu0 0.0
    %818 = vmatpush1.msra.mxu0 0.0
    %819 = vmatprep.subr.mxu0 0.0
    %820 = vmatpush1.msra.mxu0 0.0
    %821 = vmatprep.subr.mxu0 0.0
    %822 = vmatpush1.msra.mxu0 0.0
    %823 = vmatprep.subr.mxu0 0.0
    %824 = vmatpush1.msra.mxu0 0.0
    %825 = vmatprep.subr.mxu0 0.0
    %826 = vmatpush1.msra.mxu0 0.0
    %827 = vmatprep.subr.mxu0 0.0
    %828 = vmatpush1.msra.mxu0 0.0
    %829 = vmatprep.subr.mxu0 0.0
    %830 = vmatpush1.msra.mxu0 0.0
    %831 = vmatprep.subr.mxu0 0.0
    %832 = vmatpush1.msra.mxu0 0.0
    %833 = vmatprep.subr.mxu0 0.0
    %834 = vmatpush1.msra.mxu0 0.0
    %835 = vmatprep.subr.mxu0 0.0
    %836 = vmatpush1.msra.mxu0 0.0
    %837 = vmatprep.subr.mxu0 %v731
    %838 = vmatpush1.msra.mxu0 %v730
    %839 = vmatprep.subr.mxu0 %v727
    %840 = vmatpush1.msra.mxu0 %v726
    %841 = vmatprep.subr.mxu0 %v723
    %842 = vmatpush1.msra.mxu0 %v722
    %843 = vmatprep.subr.mxu0 %v719
    %844 = vmatpush1.msra.mxu0 %v718
    %845 = vmatprep.subr.mxu0 0.0
    %846 = vmatpush2.msra.mxu0 0.0
    %847 = vmatprep.subr.mxu0 0.0
    %848 = vmatpush2.msra.mxu0 0.0
    %849 = vmatprep.subr.mxu0 0.0
    %850 = vmatpush2.msra.mxu0 0.0
    %851 = vmatprep.subr.mxu0 0.0
    %852 = vmatpush2.msra.mxu0 0.0
    %853 = vmatprep.subr.mxu0 0.0
    %854 = vmatpush2.msra.mxu0 0.0
    %855 = vmatprep.subr.mxu0 0.0
    %856 = vmatpush2.msra.mxu0 0.0
    %857 = vmatprep.subr.mxu0 0.0
    %858 = vmatpush2.msra.mxu0 0.0
    %859 = vmatprep.subr.mxu0 0.0
    %860 = vmatpush2.msra.mxu0 0.0
    %861 = vmatprep.subr.mxu0 0.0
    %862 = vmatpush2.msra.mxu0 0.0
    %863 = vmatprep.subr.mxu0 0.0
    %864 = vmatpush2.msra.mxu0 0.0
    %865 = vmatprep.subr.mxu0 0.0
    %866 = vmatpush2.msra.mxu0 0.0
    %867 = vmatprep.subr.mxu0 0.0
    %868 = vmatpush2.msra.mxu0 0.0
    %869 = vmatprep.subr.mxu0 0.0
    %870 = vmatpush2.msra.mxu0 0.0
    %871 = vmatprep.subr.mxu0 0.0
    %872 = vmatpush2.msra.mxu0 0.0
    %873 = vmatprep.subr.mxu0 0.0
    %874 = vmatpush2.msra.mxu0 0.0
    %875 = vmatprep.subr.mxu0 0.0
    %876 = vmatpush2.msra.mxu0 0.0
    %877 = vmatprep.mubr.f32.mxu0 0.0
    %878 = vmatmul.mubr.f32.gmra.mxu0 %v740
    %v879 = vpop.f32.mrf.mxu0
    %v880 = vadd.f32 %v737, %v879
    %v881 = vpop.f32.mrf.mxu0
    %v882 = vadd.f32 %v737, %v881
    %883 = vdwg.mxu0
    %v884 = vsel %vm109, 1, 0
    %v885 = vsel %vm110, 1, 0
    %v886 = vlaneseq
    %v887 = vshrl.u32 %v886, 7
    %v888 = vsub.s32 0, %v887
    %v889 = vrot.slane %v884, %v888
    %v890 = vlaneseq
    %v891 = vshrl.u32 %v890, 7
    %v892 = vsub.s32 4, %v891
    %v893 = vrot.slane %v884, %v892
    %v894 = vlaneseq
    %v895 = vshrl.u32 %v894, 7
    %v896 = vsub.s32 0, %v895
    %v897 = vrot.slane %v885, %v896
    %v898 = vlaneseq
    %v899 = vshrl.u32 %v898, 7
    %v900 = vsub.s32 4, %v899
    %v901 = vrot.slane %v885, %v900
    %v902 = vlaneseq
    %v903 = vshrl.u32 %v902, 7
    %v904 = vsub.s32 0, %v903
    %v905 = vrot.slane %v889, %v904
    %v906 = vlaneseq
    %v907 = vshrl.u32 %v906, 7
    %v908 = vsub.s32 0, %v907
    %v909 = vrot.slane %v893, %v908
    %v910 = vlaneseq
    %v911 = vshrl.u32 %v910, 7
    %v912 = vsub.s32 0, %v911
    %v913 = vrot.slane %v897, %v912
    %v914 = vlaneseq
    %v915 = vshrl.u32 %v914, 7
    %v916 = vsub.s32 0, %v915
    %v917 = vrot.slane %v901, %v916
    %vm918 = vcmp.eq.s32.totalorder %v905, 1
    %vm919 = vcmp.eq.s32.totalorder %v909, 1
    %vm920 = vcmp.eq.s32.totalorder %v913, 1
    %vm921 = vcmp.eq.s32.totalorder %v917, 1
    %v922 = vsel %vm918, 0.0, %v809
    %v923 = vsel %vm919, 0.0, %v811
    %v924 = vsel %vm920, 0.0, %v880
    %v925 = vsel %vm921, 0.0, %v882
    %v930 = vcombine.low %v922, %v923
    %v931 = vcombine.low %v924, %v925
    %934 = vst [vmem:[#allocation5] sm:$0x77] %v930
    %935 = vst [vmem:[#allocation5 + $0x8] sm:$0x77] %v931
    // Predicated region
    $region38: #{tpu_custom_call.1} parent=1 // pred_check
      _
    $region39: #{tpu_custom_call.1} parent=1 // pred_check_branch
      %937 = sbr.rel (0) target = $region41
    $region40: #{tpu_custom_call.1} parent=1 // pred_region
      %s939 = ssub.s32 256, 256
      %940 = vsyncadd [#allocation3], %s939
      %s942 = sshll.u32 [#allocation5], 4
      %s943 = int_to_ptr.vmem [resolvable:$true] %s942
      %945 = dma.vmem_to_hbm [thread:$0]  %s943, 256, %s8, [#allocation3]
    $region41: #{tpu_custom_call.1} parent=1 // pred_fallthru
      _
    // Predicated region
    $region42: #{tpu_custom_call.1} parent=1 // pred_check
      _
    $region43: #{tpu_custom_call.1} parent=1 // pred_check_branch
      %947 = sbr.rel (0) target = $region45
    $region44: #{tpu_custom_call.1} parent=1 // pred_region
      %948 = dma.done [#allocation3], 256
    $region45: #{tpu_custom_call.1} parent=1 // pred_fallthru
      _
    %949 = vsyncpa [#allocation3], 1
    %950 = vsyncpa [#allocation4], 1

</llo_original>
